<compile_context>
chip_gen: v7x
topology: tpu7x:2x2x1
jax: 0.10.0
libtpu: 0.0.40
codegen_flags: <defaults>
</compile_context>

<pallas_src>
import jax
import jax.numpy as jnp
from jax import lax
from jax.experimental import pallas as pl
from jax.experimental.pallas import tpu as pltpu


def _round_up(x, m):
    return (x + m - 1) // m * m


def glycan_gcn_kernel(unit_ref, n2g_ref, table_ref, node_out_ref, partial_ref):
    """One node tile: fused one-hot gather of the per-unit MLP table (MXU)
    plus a per-tile segment-sum readout partial (MXU, bf16 operands)."""
    tile_n = unit_ref.shape[0]
    u_pad = table_ref.shape[0]
    g_pad = partial_ref.shape[0]

    # ---- fused lookup: one-hot [T, U_pad] @ table [U_pad, H2_pad] on MXU ----
    units = unit_ref[...]                                          # [T, 1] int32
    u_iota = lax.broadcasted_iota(jnp.int32, (tile_n, u_pad), 1)
    onehot_u = (units == u_iota).astype(jnp.bfloat16)              # exact 0/1
    h2 = jnp.dot(onehot_u, table_ref[...],
                 preferred_element_type=jnp.float32)               # [T, H2_pad] f32

    node_out_ref[...] = h2.astype(node_out_ref.dtype)

    # ---- per-tile segment-sum readout partial (bf16 MXU, f32 accumulate) ----
    n2g = n2g_ref[...]                                             # [1, T] int32 (padded = -1)
    g_iota = lax.broadcasted_iota(jnp.int32, (g_pad, tile_n), 0)
    onehot_g = (n2g == g_iota).astype(jnp.bfloat16)                # exact 0/1
    partial_ref[...] = jnp.dot(onehot_g, h2.astype(jnp.bfloat16),
                               preferred_element_type=jnp.float32) # [G_pad, H2_pad]


def glycan_gcn_forward(unit_type, node2graph, params, num_graphs, tile_n=1024,
                       node_feature_dtype=jnp.float32):
    """Precompute the [U, H2] per-unit table (f32, exact PyTorch math), run the
    tiled kernel over node tiles, reduce readout partials and slice padding."""
    emb, w1, b1, w2, b2 = (params["emb"], params["w1"], params["b1"],
                           params["w2"], params["b2"])
    n_nodes = unit_type.shape[0]
    num_unit, input_dim = emb.shape
    h2_dim = w2.shape[1]

    f32, bf16, i32 = jnp.float32, jnp.bfloat16, jnp.int32

    # ---- one-shot XLA prologue: collapse embedding + 2-layer MLP into a table
    # (valid because there is no message passing: h2(node) == table[unit(node)])
    table = jnp.maximum(emb.astype(f32) @ w1.astype(f32) + b1.astype(f32), 0.0)
    table = table @ w2.astype(f32) + b2.astype(f32)                # [U, H2] f32

    # ---- padded, lane/sublane-friendly shapes --------------------------------
    max_tile = _round_up(n_nodes, 8)
    if tile_n >= max_tile:
        tile_n = max_tile                       # single tile covers everything
    else:
        tile_n = max(_round_up(tile_n, 128), 128)  # multi-tile: lane-aligned
    n_pad = _round_up(n_nodes, tile_n)
    n_tiles = n_pad // tile_n
    u_pad = _round_up(num_unit, 128)
    h2_pad = _round_up(h2_dim, 128)
    g_pad = _round_up(num_graphs, 8)

    # bf16 table (zero padding contributes exactly zero to valid outputs).
    table_p = jnp.zeros((u_pad, h2_pad), bf16).at[:num_unit, :h2_dim].set(
        table.astype(bf16))

    # Per-node indices; padded nodes get graph id -1 so they never pool.
    unit_p = jnp.zeros((n_pad, 1), i32).at[:n_nodes, 0].set(unit_type.astype(i32))
    n2g_p = jnp.full((1, n_pad), -1, i32).at[0, :n_nodes].set(node2graph.astype(i32))

    out_itemsize = jnp.dtype(node_feature_dtype).itemsize
    cost = pl.CostEstimate(
        flops=2 * n_pad * u_pad * h2_pad + 2 * n_pad * g_pad * h2_pad,
        transcendentals=0,
        bytes_accessed=(8 * n_pad                          # unit + node2graph
                        + 2 * u_pad * h2_pad               # bf16 table (resident)
                        + out_itemsize * n_pad * h2_pad    # node features
                        + 4 * n_tiles * g_pad * h2_pad),   # readout partials
    )

    node_out, partials = pl.pallas_call(
        glycan_gcn_kernel,
        grid=(n_tiles,),
        in_specs=[
            pl.BlockSpec((tile_n, 1), lambda i: (i, 0)),        # unit_type  [N_pad, 1]
            pl.BlockSpec((1, tile_n), lambda i: (0, i)),        # node2graph [1, N_pad]
            pl.BlockSpec((u_pad, h2_pad), lambda i: (0, 0)),    # bf16 MLP table (resident)
        ],
        out_specs=(
            pl.BlockSpec((tile_n, h2_pad), lambda i: (i, 0)),         # node features
            pl.BlockSpec((None, g_pad, h2_pad), lambda i: (i, 0, 0)), # per-tile readout partial
        ),
        out_shape=(
            jax.ShapeDtypeStruct((n_pad, h2_pad), node_feature_dtype),
            jax.ShapeDtypeStruct((n_tiles, g_pad, h2_pad), f32),
        ),
        compiler_params=pltpu.CompilerParams(
            # No cross-tile accumulator anymore -> node axis is fully parallel
            # (megacore sharding on v7x; no-op on v5e/v6e).
            dimension_semantics=("parallel",),
            # Conservative for v7x's 64 MiB physical VMEM; footprint here is
            # only a few MiB even at tile_n=1024.
            vmem_limit_bytes=32 * 1024 * 1024,
        ),
        cost_estimate=cost,
    )(unit_p, n2g_p, table_p)

    # ---- tiny XLA epilogue: reduce per-tile partials, apply mean (1/count) ---
    graph_sum = jnp.sum(partials, axis=0)[:num_graphs, :h2_dim]     # [G, H2] f32
    counts = jnp.zeros((num_graphs,), f32).at[node2graph].add(1.0)
    graph_feature = graph_sum * (1.0 / jnp.maximum(counts, 1.0))[:, None]

    return {
        "node_feature": node_out[:n_nodes, :h2_dim],
        "graph_feature": graph_feature,
    }


def make_params(key, num_unit, input_dim, hidden_dims):
    """Deterministic synthetic parameters (shapes mirror the PyTorch module)."""
    k_emb, k_w1, k_b1, k_w2, k_b2 = jax.random.split(key, 5)
    h1, h2 = hidden_dims
    return {
        "emb": jax.random.normal(k_emb, (num_unit, input_dim), jnp.float32) * 0.1,
        "w1": jax.random.normal(k_w1, (input_dim, h1), jnp.float32) * 0.1,
        "b1": jax.random.normal(k_b1, (h1,), jnp.float32) * 0.1,
        "w2": jax.random.normal(k_w2, (h1, h2), jnp.float32) * 0.1,
        "b2": jax.random.normal(k_b2, (h2,), jnp.float32) * 0.1,
    }


def reference_forward(unit_type, node2graph, num_graphs, params,
                      table_dtype=jnp.float32):
    """Plain-JAX reference of the PyTorch forward; with table_dtype=bf16 it
    mimics the kernel's bf16 table rounding for a tight comparison."""
    f32 = jnp.float32
    emb, w1, b1 = params["emb"].astype(f32), params["w1"].astype(f32), params["b1"].astype(f32)
    w2, b2 = params["w2"].astype(f32), params["b2"].astype(f32)

    table = jnp.maximum(emb @ w1 + b1, 0.0) @ w2 + b2               # [U, H2] f32
    table = table.astype(table_dtype).astype(f32)

    nf = table[unit_type]
    onehot = (node2graph[None, :] == jnp.arange(num_graphs)[:, None]).astype(f32)
    counts = jnp.maximum(onehot.sum(axis=1, keepdims=True), 1.0)
    gf = (onehot @ nf) / counts
    return {"graph_feature": gf, "node_feature": nf}


if __name__ == "__main__":
    # Small shapes: 10 monosaccharide types, input_dim=32, hidden_dims=[32, 32],
    # 300 nodes across 4 graphs.
    num_unit, input_dim = 10, 32
    hidden_dims = [32, 32]
    n_nodes, num_graphs = 300, 4

    key = jax.random.PRNGKey(0)
    k_params, k_units = jax.random.split(key)
    params = make_params(k_params, num_unit, input_dim, hidden_dims)

    unit_type = jax.random.randint(k_units, (n_nodes,), 0, num_unit, dtype=jnp.int32)
    node2graph = (jnp.arange(n_nodes, dtype=jnp.int32) % num_graphs).astype(jnp.int32)

    fwd = jax.jit(glycan_gcn_forward,
                  static_argnames=("num_graphs", "tile_n", "node_feature_dtype"))

    ref_tight = reference_forward(unit_type, node2graph, num_graphs, params,
                                  table_dtype=jnp.bfloat16)   # matches kernel rounding
    ref_f32 = reference_forward(unit_type, node2graph, num_graphs, params)

    def check(out, tol_node=1e-3, tol_graph=1e-3):
        assert out["node_feature"].shape == (n_nodes, hidden_dims[-1])
        assert out["graph_feature"].shape == (num_graphs, hidden_dims[-1])
        nf = out["node_feature"].astype(jnp.float32)
        gf = out["graph_feature"].astype(jnp.float32)
        # Tight check vs. reference with the same bf16 table rounding.
        assert jnp.allclose(nf, ref_tight["node_feature"], atol=tol_node, rtol=tol_node)
        assert jnp.allclose(gf, ref_tight["graph_feature"], atol=tol_graph, rtol=tol_graph)
        # Loose check vs. pure-f32 PyTorch semantics (bf16 rounding only).
        assert jnp.allclose(nf, ref_f32["node_feature"], atol=2e-2, rtol=2e-2)
        assert jnp.allclose(gf, ref_f32["graph_feature"], atol=2e-2, rtol=2e-2)

    # Run 1: default tile size (single node tile).
    out = fwd(unit_type, node2graph, params, num_graphs=num_graphs)
    jax.block_until_ready(out["graph_feature"])
    jax.block_until_ready(out["node_feature"])
    check(out)

    # Run 2: small tile (3 node tiles) -> exercises the multi-tile parallel
    # grid and the partial-readout reduction.
    out_mt = fwd(unit_type, node2graph, params, num_graphs=num_graphs, tile_n=128)
    jax.block_until_ready(out_mt["graph_feature"])
    check(out_mt)

    # Run 3: bf16 node features (halved HBM writeback; values are already
    # bf16-rounded so no extra error).
    out_bf = fwd(unit_type, node2graph, params, num_graphs=num_graphs,
                 node_feature_dtype=jnp.bfloat16)
    jax.block_until_ready(out_bf["node_feature"])
    check(out_bf, tol_node=4e-3, tol_graph=1e-3)

    print("KERNEL_OK")
</pallas_src>

<mosaic_0001>
module attributes {stable_mosaic.version = 11 : i64} {
  func.func @glycan_gcn_kernel(%arg0: i32, %arg1: memref<304x1xi32, #tpu.memory_space<vmem>>, %arg2: memref<1x304xi32, #tpu.memory_space<vmem>>, %arg3: memref<128x128xbf16, #tpu.memory_space<vmem>>, %arg4: memref<304x128xf32, #tpu.memory_space<vmem>>, %arg5: memref<1x8x128xf32, #tpu.memory_space<vmem>>) attributes {dimension_semantics = [#tpu.dimension_semantics<parallel>], iteration_bounds = array<i64: 1>, scalar_prefetch = 0 : i64, scratch_operands = 0 : i64, tpu.core_type = #tpu.core_type<tc>, window_params = [{transform_indices = @transform_0, window_bounds = array<i64: 304, 1>}, {transform_indices = @transform_1, window_bounds = array<i64: 1, 304>}, {pipeline_mode = #tpu.pipeline_mode<synchronous>, transform_indices = @transform_2, window_bounds = array<i64: 128, 128>}, {transform_indices = @transform_3, window_bounds = array<i64: 304, 128>}, {transform_indices = @transform_4, window_bounds = array<i64: 1, 8, 128>}]} {
    %c0 = arith.constant 0 : index
    %c0_0 = arith.constant 0 : index
    %0 = vector.load %arg1[%c0, %c0_0] : memref<304x1xi32, #tpu.memory_space<vmem>>, vector<304x1xi32>
    %1 = tpu.iota {dimensions = array<i32: 1>} : vector<304x128xi32>
    %2 = vector.broadcast %0 : vector<304x1xi32> to vector<304x128xi32>
    %3 = arith.cmpi eq, %2, %1 : vector<304x128xi32>
    %4 = arith.extui %3 : vector<304x128xi1> to vector<304x128xi32>
    %5 = arith.sitofp %4 : vector<304x128xi32> to vector<304x128xf32>
    %6 = arith.truncf %5 : vector<304x128xf32> to vector<304x128xbf16>
    %c0_1 = arith.constant 0 : index
    %c0_2 = arith.constant 0 : index
    %7 = vector.load %arg3[%c0_1, %c0_2] : memref<128x128xbf16, #tpu.memory_space<vmem>>, vector<128x128xbf16>
    %cst = arith.constant dense<0.000000e+00> : vector<304x128xf32>
    %8 = tpu.matmul %6, %7, %cst {dimension_numbers = #tpu.dot_dimension_numbers<[1], [0], [0], [1], [0, 0, 1, 1], [], []>} : vector<304x128xbf16>, vector<128x128xbf16>, vector<304x128xf32> -> vector<304x128xf32>
    %c0_3 = arith.constant 0 : index
    %c0_4 = arith.constant 0 : index
    %9 = vector.load %arg4[%c0_3, %c0_4] : memref<304x128xf32, #tpu.memory_space<vmem>>, vector<304x128xf32>
    tpu.vector_store %arg4[%c0_3, %c0_4], %8 {strides = array<i32>} : memref<304x128xf32, #tpu.memory_space<vmem>>, vector<304x128xf32>,
    %c0_5 = arith.constant 0 : index
    %c0_6 = arith.constant 0 : index
    %10 = vector.load %arg2[%c0_5, %c0_6] : memref<1x304xi32, #tpu.memory_space<vmem>>, vector<1x304xi32>
    %11 = tpu.iota {dimensions = array<i32: 0>} : vector<8x304xi32>
    %12 = vector.broadcast %10 : vector<1x304xi32> to vector<8x304xi32>
    %13 = arith.cmpi eq, %12, %11 : vector<8x304xi32>
    %14 = arith.extui %13 : vector<8x304xi1> to vector<8x304xi32>
    %15 = arith.sitofp %14 : vector<8x304xi32> to vector<8x304xf32>
    %16 = arith.truncf %15 : vector<8x304xf32> to vector<8x304xbf16>
    %17 = arith.truncf %8 : vector<304x128xf32> to vector<304x128xbf16>
    %cst_7 = arith.constant dense<0.000000e+00> : vector<8x128xf32>
    %18 = tpu.matmul %16, %17, %cst_7 {dimension_numbers = #tpu.dot_dimension_numbers<[1], [0], [0], [1], [0, 0, 1, 1], [], []>} : vector<8x304xbf16>, vector<304x128xbf16>, vector<8x128xf32> -> vector<8x128xf32>
    %c0_8 = arith.constant 0 : index
    %c0_9 = arith.constant 0 : index
    %c0_10 = arith.constant 0 : index
    %19 = vector.load %arg5[%c0_8, %c0_9, %c0_10] : memref<1x8x128xf32, #tpu.memory_space<vmem>>, vector<1x8x128xf32>
    %20 = vector.shape_cast %19 : vector<1x8x128xf32> to vector<8x128xf32>
    %21 = vector.shape_cast %18 : vector<8x128xf32> to vector<1x8x128xf32>
    tpu.vector_store %arg5[%c0_8, %c0_9, %c0_10], %21 {strides = array<i32>} : memref<1x8x128xf32, #tpu.memory_space<vmem>>, vector<1x8x128xf32>,
    return
  }
  func.func @transform_0(%arg0: i32) -> (i32, i32) {
    %c0_i32 = arith.constant 0 : i32
    %c0_i32_0 = arith.constant 0 : i32
    return %arg0, %c0_i32 : i32, i32
  }
  func.func @transform_1(%arg0: i32) -> (i32, i32) {
    %c0_i32 = arith.constant 0 : i32
    %c0_i32_0 = arith.constant 0 : i32
    return %c0_i32, %arg0 : i32, i32
  }
  func.func @transform_2(%arg0: i32) -> (i32, i32) {
    %c0_i32 = arith.constant 0 : i32
    %c0_i32_0 = arith.constant 0 : i32
    %c0_i32_1 = arith.constant 0 : i32
    return %c0_i32, %c0_i32_0 : i32, i32
  }
  func.func @transform_3(%arg0: i32) -> (i32, i32) {
    %c0_i32 = arith.constant 0 : i32
    %c0_i32_0 = arith.constant 0 : i32
    return %arg0, %c0_i32 : i32, i32
  }
  func.func @transform_4(%arg0: i32) -> (i32, i32, i32) {
    %c0_i32 = arith.constant 0 : i32
    %c0_i32_0 = arith.constant 0 : i32
    %c0_i32_1 = arith.constant 0 : i32
    return %arg0, %c0_i32, %c0_i32_0 : i32, i32, i32
  }
}

</mosaic_0001>

<llo_original>
// kernel: glycan_gcn_forward.1
$region0: #{glycan_gcn_forward.1}
  #allocation0 [shape = 'u32[]', space=smem, size = 0x4, offset = 0x4, fixed_abs, tag = 'smem constant byte address 0x4 - core index']
  #allocation1 [shape = 'u32[144,128]{1,0:T(1,128)}', space=vmem, size = 0x12000, scoped, tag = 'internal scratch']
  %s0 = inlined_call_operand.vmem [shape: s32[304,1], index: 0, kind: input, shape index: {}]
  %s1 = inlined_call_operand.vmem [shape: s32[1,304], index: 1, kind: input, shape index: {}]
  %s2 = inlined_call_operand.vmem [shape: bf16[128,128], index: 2, kind: input, shape index: {}]
  %s3 = inlined_call_operand.vmem [shape: f32[304,128], index: 3, kind: output, shape index: {0}]
  %s4 = inlined_call_operand.vmem [shape: f32[1,8,128], index: 4, kind: output, shape index: {1}]
  %5 = xla_tuple %s3, %s4
  %s6 = sld [smem:[#allocation0]]
  $region30: #{glycan_gcn_forward.1} parent=0
    _
  %s8 = ssub.s32 1, %s6
  %s9 = scalar_select 0, %s8, %s6
  // Predicated region
  $region2: #{glycan_gcn_forward.1} parent=0 // pred_check
    _
  $region3: #{glycan_gcn_forward.1} parent=0 // pred_check_branch
    %11 = sbr.rel (0) target = $region5
  $region4: #{glycan_gcn_forward.1} parent=0 // pred_region
    _
  $region5: #{glycan_gcn_forward.1} parent=0 // pred_fallthru
    _
  // Predicated region
  $region6: #{glycan_gcn_forward.1} parent=0 // pred_check
    _
  $region7: #{glycan_gcn_forward.1} parent=0 // pred_check_branch
    %13 = sbr.rel (0) target = $region9
  $region8: #{glycan_gcn_forward.1} parent=0 // pred_region
    _
  $region9: #{glycan_gcn_forward.1} parent=0 // pred_fallthru
    _
  // Predicated region
  $region10: #{glycan_gcn_forward.1} parent=0 // pred_check
    _
  $region11: #{glycan_gcn_forward.1} parent=0 // pred_check_branch
    %15 = sbr.rel (0) target = $region13
  $region12: #{glycan_gcn_forward.1} parent=0 // pred_region
    _
  $region13: #{glycan_gcn_forward.1} parent=0 // pred_fallthru
    _
  %v17 = vld [vmem:[%s0] sm:$0xff]
  %v18 = vld [vmem:[%s0 + $0x8] sm:$0xff]
  %v19 = vld [vmem:[%s0 + $0x10] sm:$0xff]
  %v20 = vld [vmem:[%s0 + $0x18] sm:$0xff]
  %v21 = vld [vmem:[%s0 + $0x20] sm:$0xff]
  %v22 = vld [vmem:[%s0 + $0x28] sm:$0xff]
  %v23 = vld [vmem:[%s0 + $0x30] sm:$0xff]
  %v24 = vld [vmem:[%s0 + $0x38] sm:$0xff]
  %v25 = vld [vmem:[%s0 + $0x40] sm:$0xff]
  %v26 = vld [vmem:[%s0 + $0x48] sm:$0xff]
  %v27 = vld [vmem:[%s0 + $0x50] sm:$0xff]
  %v28 = vld [vmem:[%s0 + $0x58] sm:$0xff]
  %v29 = vld [vmem:[%s0 + $0x60] sm:$0xff]
  %v30 = vld [vmem:[%s0 + $0x68] sm:$0xff]
  %v31 = vld [vmem:[%s0 + $0x70] sm:$0xff]
  %v32 = vld [vmem:[%s0 + $0x78] sm:$0xff]
  %v33 = vld [vmem:[%s0 + $0x80] sm:$0xff]
  %v34 = vld [vmem:[%s0 + $0x88] sm:$0xff]
  %v35 = vld [vmem:[%s0 + $0x90] sm:$0xff]
  %v36 = vld [vmem:[%s0 + $0x98] sm:$0xff]
  %v37 = vld [vmem:[%s0 + $0xa0] sm:$0xff]
  %v38 = vld [vmem:[%s0 + $0xa8] sm:$0xff]
  %v39 = vld [vmem:[%s0 + $0xb0] sm:$0xff]
  %v40 = vld [vmem:[%s0 + $0xb8] sm:$0xff]
  %v41 = vld [vmem:[%s0 + $0xc0] sm:$0xff]
  %v42 = vld [vmem:[%s0 + $0xc8] sm:$0xff]
  %v43 = vld [vmem:[%s0 + $0xd0] sm:$0xff]
  %v44 = vld [vmem:[%s0 + $0xd8] sm:$0xff]
  %v45 = vld [vmem:[%s0 + $0xe0] sm:$0xff]
  %v46 = vld [vmem:[%s0 + $0xe8] sm:$0xff]
  %v47 = vld [vmem:[%s0 + $0xf0] sm:$0xff]
  %v48 = vld [vmem:[%s0 + $0xf8] sm:$0xff]
  %v49 = vld [vmem:[%s0 + $0x100] sm:$0xff]
  %v50 = vld [vmem:[%s0 + $0x108] sm:$0xff]
  %v51 = vld [vmem:[%s0 + $0x110] sm:$0xff]
  %v52 = vld [vmem:[%s0 + $0x118] sm:$0xff]
  %v53 = vld [vmem:[%s0 + $0x120] sm:$0xff]
  %v54 = vld [vmem:[%s0 + $0x128] sm:$0xff]
  %v55 = vlaneseq
  %v56 = vand.u32 %v55, 127
  %57 = vset.pattern.permute.xlu0 0
  %58 = vperm.xlu0 %57, %v17
  %v59 = vpop.permute.xlu0 %58
  %60 = vset.pattern.permute.xlu0 0
  %61 = vperm.xlu0 %60, %v18
  %v62 = vpop.permute.xlu0 %61
  %63 = vset.pattern.permute.xlu0 0
  %64 = vperm.xlu0 %63, %v19
  %v65 = vpop.permute.xlu0 %64
  %66 = vset.pattern.permute.xlu0 0
  %67 = vperm.xlu0 %66, %v20
  %v68 = vpop.permute.xlu0 %67
  %69 = vset.pattern.permute.xlu0 0
  %70 = vperm.xlu0 %69, %v21
  %v71 = vpop.permute.xlu0 %70
  %72 = vset.pattern.permute.xlu0 0
  %73 = vperm.xlu0 %72, %v22
  %v74 = vpop.permute.xlu0 %73
  %75 = vset.pattern.permute.xlu0 0
  %76 = vperm.xlu0 %75, %v23
  %v77 = vpop.permute.xlu0 %76
  %78 = vset.pattern.permute.xlu0 0
  %79 = vperm.xlu0 %78, %v24
  %v80 = vpop.permute.xlu0 %79
  %81 = vset.pattern.permute.xlu0 0
  %82 = vperm.xlu0 %81, %v25
  %v83 = vpop.permute.xlu0 %82
  %84 = vset.pattern.permute.xlu0 0
  %85 = vperm.xlu0 %84, %v26
  %v86 = vpop.permute.xlu0 %85
  %87 = vset.pattern.permute.xlu0 0
  %88 = vperm.xlu0 %87, %v27
  %v89 = vpop.permute.xlu0 %88
  %90 = vset.pattern.permute.xlu0 0
  %91 = vperm.xlu0 %90, %v28
  %v92 = vpop.permute.xlu0 %91
  %93 = vset.pattern.permute.xlu0 0
  %94 = vperm.xlu0 %93, %v29
  %v95 = vpop.permute.xlu0 %94
  %96 = vset.pattern.permute.xlu0 0
  %97 = vperm.xlu0 %96, %v30
  %v98 = vpop.permute.xlu0 %97
  %99 = vset.pattern.permute.xlu0 0
  %100 = vperm.xlu0 %99, %v31
  %v101 = vpop.permute.xlu0 %100
  %102 = vset.pattern.permute.xlu0 0
  %103 = vperm.xlu0 %102, %v32
  %v104 = vpop.permute.xlu0 %103
  %105 = vset.pattern.permute.xlu0 0
  %106 = vperm.xlu0 %105, %v33
  %v107 = vpop.permute.xlu0 %106
  %108 = vset.pattern.permute.xlu0 0
  %109 = vperm.xlu0 %108, %v34
  %v110 = vpop.permute.xlu0 %109
  %111 = vset.pattern.permute.xlu0 0
  %112 = vperm.xlu0 %111, %v35
  %v113 = vpop.permute.xlu0 %112
  %114 = vset.pattern.permute.xlu0 0
  %115 = vperm.xlu0 %114, %v36
  %v116 = vpop.permute.xlu0 %115
  %117 = vset.pattern.permute.xlu0 0
  %118 = vperm.xlu0 %117, %v37
  %v119 = vpop.permute.xlu0 %118
  %120 = vset.pattern.permute.xlu0 0
  %121 = vperm.xlu0 %120, %v38
  %v122 = vpop.permute.xlu0 %121
  %123 = vset.pattern.permute.xlu0 0
  %124 = vperm.xlu0 %123, %v39
  %v125 = vpop.permute.xlu0 %124
  %126 = vset.pattern.permute.xlu0 0
  %127 = vperm.xlu0 %126, %v40
  %v128 = vpop.permute.xlu0 %127
  %129 = vset.pattern.permute.xlu0 0
  %130 = vperm.xlu0 %129, %v41
  %v131 = vpop.permute.xlu0 %130
  %132 = vset.pattern.permute.xlu0 0
  %133 = vperm.xlu0 %132, %v42
  %v134 = vpop.permute.xlu0 %133
  %135 = vset.pattern.permute.xlu0 0
  %136 = vperm.xlu0 %135, %v43
  %v137 = vpop.permute.xlu0 %136
  %138 = vset.pattern.permute.xlu0 0
  %139 = vperm.xlu0 %138, %v44
  %v140 = vpop.permute.xlu0 %139
  %141 = vset.pattern.permute.xlu0 0
  %142 = vperm.xlu0 %141, %v45
  %v143 = vpop.permute.xlu0 %142
  %144 = vset.pattern.permute.xlu0 0
  %145 = vperm.xlu0 %144, %v46
  %v146 = vpop.permute.xlu0 %145
  %147 = vset.pattern.permute.xlu0 0
  %148 = vperm.xlu0 %147, %v47
  %v149 = vpop.permute.xlu0 %148
  %150 = vset.pattern.permute.xlu0 0
  %151 = vperm.xlu0 %150, %v48
  %v152 = vpop.permute.xlu0 %151
  %153 = vset.pattern.permute.xlu0 0
  %154 = vperm.xlu0 %153, %v49
  %v155 = vpop.permute.xlu0 %154
  %156 = vset.pattern.permute.xlu0 0
  %157 = vperm.xlu0 %156, %v50
  %v158 = vpop.permute.xlu0 %157
  %159 = vset.pattern.permute.xlu0 0
  %160 = vperm.xlu0 %159, %v51
  %v161 = vpop.permute.xlu0 %160
  %162 = vset.pattern.permute.xlu0 0
  %163 = vperm.xlu0 %162, %v52
  %v164 = vpop.permute.xlu0 %163
  %165 = vset.pattern.permute.xlu0 0
  %166 = vperm.xlu0 %165, %v53
  %v167 = vpop.permute.xlu0 %166
  %168 = vset.pattern.permute.xlu0 0
  %169 = vperm.xlu0 %168, %v54
  %v170 = vpop.permute.xlu0 %169
  %vm171 = vcmp.eq.s32.totalorder %v59, %v56
  %vm172 = vcmp.eq.s32.totalorder %v62, %v56
  %vm173 = vcmp.eq.s32.totalorder %v65, %v56
  %vm174 = vcmp.eq.s32.totalorder %v68, %v56
  %vm175 = vcmp.eq.s32.totalorder %v71, %v56
  %vm176 = vcmp.eq.s32.totalorder %v74, %v56
  %vm177 = vcmp.eq.s32.totalorder %v77, %v56
  %vm178 = vcmp.eq.s32.totalorder %v80, %v56
  %vm179 = vcmp.eq.s32.totalorder %v83, %v56
  %vm180 = vcmp.eq.s32.totalorder %v86, %v56
  %vm181 = vcmp.eq.s32.totalorder %v89, %v56
  %vm182 = vcmp.eq.s32.totalorder %v92, %v56
  %vm183 = vcmp.eq.s32.totalorder %v95, %v56
  %vm184 = vcmp.eq.s32.totalorder %v98, %v56
  %vm185 = vcmp.eq.s32.totalorder %v101, %v56
  %vm186 = vcmp.eq.s32.totalorder %v104, %v56
  %vm187 = vcmp.eq.s32.totalorder %v107, %v56
  %vm188 = vcmp.eq.s32.totalorder %v110, %v56
  %vm189 = vcmp.eq.s32.totalorder %v113, %v56
  %vm190 = vcmp.eq.s32.totalorder %v116, %v56
  %vm191 = vcmp.eq.s32.totalorder %v119, %v56
  %vm192 = vcmp.eq.s32.totalorder %v122, %v56
  %vm193 = vcmp.eq.s32.totalorder %v125, %v56
  %vm194 = vcmp.eq.s32.totalorder %v128, %v56
  %vm195 = vcmp.eq.s32.totalorder %v131, %v56
  %vm196 = vcmp.eq.s32.totalorder %v134, %v56
  %vm197 = vcmp.eq.s32.totalorder %v137, %v56
  %vm198 = vcmp.eq.s32.totalorder %v140, %v56
  %vm199 = vcmp.eq.s32.totalorder %v143, %v56
  %vm200 = vcmp.eq.s32.totalorder %v146, %v56
  %vm201 = vcmp.eq.s32.totalorder %v149, %v56
  %vm202 = vcmp.eq.s32.totalorder %v152, %v56
  %vm203 = vcmp.eq.s32.totalorder %v155, %v56
  %vm204 = vcmp.eq.s32.totalorder %v158, %v56
  %vm205 = vcmp.eq.s32.totalorder %v161, %v56
  %vm206 = vcmp.eq.s32.totalorder %v164, %v56
  %vm207 = vcmp.eq.s32.totalorder %v167, %v56
  %vm208 = vcmp.eq.s32.totalorder %v170, %v56
  %v209 = vsel %vm171, 1, 0
  %v210 = vsel %vm172, 1, 0
  %v211 = vsel %vm173, 1, 0
  %v212 = vsel %vm174, 1, 0
  %v213 = vsel %vm175, 1, 0
  %v214 = vsel %vm176, 1, 0
  %v215 = vsel %vm177, 1, 0
  %v216 = vsel %vm178, 1, 0
  %v217 = vsel %vm179, 1, 0
  %v218 = vsel %vm180, 1, 0
  %v219 = vsel %vm181, 1, 0
  %v220 = vsel %vm182, 1, 0
  %v221 = vsel %vm183, 1, 0
  %v222 = vsel %vm184, 1, 0
  %v223 = vsel %vm185, 1, 0
  %v224 = vsel %vm186, 1, 0
  %v225 = vsel %vm187, 1, 0
  %v226 = vsel %vm188, 1, 0
  %v227 = vsel %vm189, 1, 0
  %v228 = vsel %vm190, 1, 0
  %v229 = vsel %vm191, 1, 0
  %v230 = vsel %vm192, 1, 0
  %v231 = vsel %vm193, 1, 0
  %v232 = vsel %vm194, 1, 0
  %v233 = vsel %vm195, 1, 0
  %v234 = vsel %vm196, 1, 0
  %v235 = vsel %vm197, 1, 0
  %v236 = vsel %vm198, 1, 0
  %v237 = vsel %vm199, 1, 0
  %v238 = vsel %vm200, 1, 0
  %v239 = vsel %vm201, 1, 0
  %v240 = vsel %vm202, 1, 0
  %v241 = vsel %vm203, 1, 0
  %v242 = vsel %vm204, 1, 0
  %v243 = vsel %vm205, 1, 0
  %v244 = vsel %vm206, 1, 0
  %v245 = vsel %vm207, 1, 0
  %v246 = vsel %vm208, 1, 0
  %v247 = vcvt.s32.f32 %v209
  %v248 = vcvt.s32.f32 %v210
  %v249 = vcvt.s32.f32 %v211
  %v250 = vcvt.s32.f32 %v212
  %v251 = vcvt.s32.f32 %v213
  %v252 = vcvt.s32.f32 %v214
  %v253 = vcvt.s32.f32 %v215
  %v254 = vcvt.s32.f32 %v216
  %v255 = vcvt.s32.f32 %v217
  %v256 = vcvt.s32.f32 %v218
  %v257 = vcvt.s32.f32 %v219
  %v258 = vcvt.s32.f32 %v220
  %v259 = vcvt.s32.f32 %v221
  %v260 = vcvt.s32.f32 %v222
  %v261 = vcvt.s32.f32 %v223
  %v262 = vcvt.s32.f32 %v224
  %v263 = vcvt.s32.f32 %v225
  %v264 = vcvt.s32.f32 %v226
  %v265 = vcvt.s32.f32 %v227
  %v266 = vcvt.s32.f32 %v228
  %v267 = vcvt.s32.f32 %v229
  %v268 = vcvt.s32.f32 %v230
  %v269 = vcvt.s32.f32 %v231
  %v270 = vcvt.s32.f32 %v232
  %v271 = vcvt.s32.f32 %v233
  %v272 = vcvt.s32.f32 %v234
  %v273 = vcvt.s32.f32 %v235
  %v274 = vcvt.s32.f32 %v236
  %v275 = vcvt.s32.f32 %v237
  %v276 = vcvt.s32.f32 %v238
  %v277 = vcvt.s32.f32 %v239
  %v278 = vcvt.s32.f32 %v240
  %v279 = vcvt.s32.f32 %v241
  %v280 = vcvt.s32.f32 %v242
  %v281 = vcvt.s32.f32 %v243
  %v282 = vcvt.s32.f32 %v244
  %v283 = vcvt.s32.f32 %v245
  %v284 = vcvt.s32.f32 %v246
  %v285 = vpack.c.bf16 %v248, %v247
  %v286 = vpack.c.bf16 %v250, %v249
  %v287 = vpack.c.bf16 %v252, %v251
  %v288 = vpack.c.bf16 %v254, %v253
  %v289 = vpack.c.bf16 %v256, %v255
  %v290 = vpack.c.bf16 %v258, %v257
  %v291 = vpack.c.bf16 %v260, %v259
  %v292 = vpack.c.bf16 %v262, %v261
  %v293 = vpack.c.bf16 %v264, %v263
  %v294 = vpack.c.bf16 %v266, %v265
  %v295 = vpack.c.bf16 %v268, %v267
  %v296 = vpack.c.bf16 %v270, %v269
  %v297 = vpack.c.bf16 %v272, %v271
  %v298 = vpack.c.bf16 %v274, %v273
  %v299 = vpack.c.bf16 %v276, %v275
  %v300 = vpack.c.bf16 %v278, %v277
  %v301 = vpack.c.bf16 %v280, %v279
  %v302 = vpack.c.bf16 %v282, %v281
  %v303 = vpack.c.bf16 %v284, %v283
  %v304 = vld [vmem:[%s2] sm:$0xf]
  %v305 = vld [vmem:[%s2 + $0x4] sm:$0xf]
  %v306 = vld [vmem:[%s2 + $0x8] sm:$0xf]
  %v307 = vld [vmem:[%s2 + $0xc] sm:$0xf]
  %v308 = vld [vmem:[%s2 + $0x10] sm:$0xf]
  %v309 = vld [vmem:[%s2 + $0x14] sm:$0xf]
  %v310 = vld [vmem:[%s2 + $0x18] sm:$0xf]
  %v311 = vld [vmem:[%s2 + $0x1c] sm:$0xf]
  %v312 = vld [vmem:[%s2 + $0x20] sm:$0xf]
  %v313 = vld [vmem:[%s2 + $0x24] sm:$0xf]
  %v314 = vld [vmem:[%s2 + $0x28] sm:$0xf]
  %v315 = vld [vmem:[%s2 + $0x2c] sm:$0xf]
  %v316 = vld [vmem:[%s2 + $0x30] sm:$0xf]
  %v317 = vld [vmem:[%s2 + $0x34] sm:$0xf]
  %v318 = vld [vmem:[%s2 + $0x38] sm:$0xf]
  %v319 = vld [vmem:[%s2 + $0x3c] sm:$0xf]
  %v336 = vunpack.c.l.b16 %v304
  %v337 = vunpack.c.l.b16 %v305
  %v338 = vunpack.c.l.b16 %v306
  %v339 = vunpack.c.l.b16 %v307
  %v340 = vunpack.c.l.b16 %v308
  %v341 = vunpack.c.l.b16 %v309
  %v342 = vunpack.c.l.b16 %v310
  %v343 = vunpack.c.l.b16 %v311
  %v344 = vunpack.c.l.b16 %v312
  %v345 = vunpack.c.l.b16 %v313
  %v346 = vunpack.c.l.b16 %v314
  %v347 = vunpack.c.l.b16 %v315
  %v348 = vunpack.c.l.b16 %v316
  %v349 = vunpack.c.l.b16 %v317
  %v350 = vunpack.c.l.b16 %v318
  %v351 = vunpack.c.l.b16 %v319
  %v352 = vpack.c.b16 %v337, %v336
  %v353 = vpack.c.b16 %v339, %v338
  %v354 = vpack.c.b16 %v341, %v340
  %v355 = vpack.c.b16 %v343, %v342
  %v356 = vpack.c.b16 %v345, %v344
  %v357 = vpack.c.b16 %v347, %v346
  %v358 = vpack.c.b16 %v349, %v348
  %v359 = vpack.c.b16 %v351, %v350
  %368 = vmatprep.subr.bf16.mxu0 0
  %369 = vmatpush1.bf16.msra.mxu0 %v352
  %370 = vmatprep.subr.bf16.mxu0 0
  %371 = vmatpush1.bf16.msra.mxu0 %v353
  %372 = vmatprep.subr.bf16.mxu0 0
  %373 = vmatpush1.bf16.msra.mxu0 %v354
  %374 = vmatprep.subr.bf16.mxu0 0
  %375 = vmatpush1.bf16.msra.mxu0 %v355
  %376 = vmatprep.subr.bf16.mxu0 0
  %377 = vmatpush1.bf16.msra.mxu0 %v356
  %378 = vmatprep.subr.bf16.mxu0 0
  %379 = vmatpush1.bf16.msra.mxu0 %v357
  %380 = vmatprep.subr.bf16.mxu0 0
  %381 = vmatpush1.bf16.msra.mxu0 %v358
  %382 = vmatprep.subr.bf16.mxu0 0
  %383 = vmatpush1.bf16.msra.mxu0 %v359
  %384 = vmatprep.subr.bf16.mxu0 0
  %385 = vmatpush1.bf16.msra.mxu0 0
  %386 = vmatprep.subr.bf16.mxu0 0
  %387 = vmatpush1.bf16.msra.mxu0 0
  %388 = vmatprep.subr.bf16.mxu0 0
  %389 = vmatpush1.bf16.msra.mxu0 0
  %390 = vmatprep.subr.bf16.mxu0 0
  %391 = vmatpush1.bf16.msra.mxu0 0
  %392 = vmatprep.subr.bf16.mxu0 0
  %393 = vmatpush1.bf16.msra.mxu0 0
  %394 = vmatprep.subr.bf16.mxu0 0
  %395 = vmatpush1.bf16.msra.mxu0 0
  %396 = vmatprep.subr.bf16.mxu0 0
  %397 = vmatpush1.bf16.msra.mxu0 0
  %398 = vmatprep.subr.bf16.mxu0 0
  %399 = vmatpush1.bf16.msra.mxu0 0
  %400 = vmatprep.mubr.bf16.mxu0 0
  %401 = vmatmul.mubr.bf16.gmra.mrb[0].mxu0 %v285
  %v402 = vpop.f32.mrb[0].mxu0
  %v403 = vadd.f32 0.0, %v402
  %v404 = vpop.f32.mrb[0].mxu0
  %v405 = vpop.f32.mrb[0].mxu0
  %v406 = vadd.f32 0.0, %v405
  %v407 = vpop.f32.mrb[0].mxu0
  %408 = vmatprep.mubr.bf16.mxu0 0
  %409 = vmatmul.mubr.bf16.gmra.mrb[0].mxu0 %v286
  %v410 = vpop.f32.mrb[0].mxu0
  %v411 = vadd.f32 0.0, %v410
  %v412 = vpop.f32.mrb[0].mxu0
  %v413 = vpop.f32.mrb[0].mxu0
  %v414 = vadd.f32 0.0, %v413
  %v415 = vpop.f32.mrb[0].mxu0
  %416 = vmatprep.mubr.bf16.mxu0 0
  %417 = vmatmul.mubr.bf16.gmra.mrb[0].mxu0 %v287
  %v418 = vpop.f32.mrb[0].mxu0
  %v419 = vadd.f32 0.0, %v418
  %v420 = vpop.f32.mrb[0].mxu0
  %v421 = vpop.f32.mrb[0].mxu0
  %v422 = vadd.f32 0.0, %v421
  %v423 = vpop.f32.mrb[0].mxu0
  %424 = vmatprep.mubr.bf16.mxu0 0
  %425 = vmatmul.mubr.bf16.gmra.mrb[0].mxu0 %v288
  %v426 = vpop.f32.mrb[0].mxu0
  %v427 = vadd.f32 0.0, %v426
  %v428 = vpop.f32.mrb[0].mxu0
  %v429 = vpop.f32.mrb[0].mxu0
  %v430 = vadd.f32 0.0, %v429
  %v431 = vpop.f32.mrb[0].mxu0
  %432 = vmatprep.mubr.bf16.mxu0 0
  %433 = vmatmul.mubr.bf16.gmra.mrb[0].mxu0 %v289
  %v434 = vpop.f32.mrb[0].mxu0
  %v435 = vadd.f32 0.0, %v434
  %v436 = vpop.f32.mrb[0].mxu0
  %v437 = vpop.f32.mrb[0].mxu0
  %v438 = vadd.f32 0.0, %v437
  %v439 = vpop.f32.mrb[0].mxu0
  %440 = vmatprep.mubr.bf16.mxu0 0
  %441 = vmatmul.mubr.bf16.gmra.mrb[0].mxu0 %v290
  %v442 = vpop.f32.mrb[0].mxu0
  %v443 = vadd.f32 0.0, %v442
  %v444 = vpop.f32.mrb[0].mxu0
  %v445 = vpop.f32.mrb[0].mxu0
  %v446 = vadd.f32 0.0, %v445
  %v447 = vpop.f32.mrb[0].mxu0
  %448 = vmatprep.mubr.bf16.mxu0 0
  %449 = vmatmul.mubr.bf16.gmra.mrb[0].mxu0 %v291
  %v450 = vpop.f32.mrb[0].mxu0
  %v451 = vadd.f32 0.0, %v450
  %v452 = vpop.f32.mrb[0].mxu0
  %v453 = vpop.f32.mrb[0].mxu0
  %v454 = vadd.f32 0.0, %v453
  %v455 = vpop.f32.mrb[0].mxu0
  %456 = vmatprep.mubr.bf16.mxu0 0
  %457 = vmatmul.mubr.bf16.gmra.mrb[0].mxu0 %v292
  %v458 = vpop.f32.mrb[0].mxu0
  %v459 = vadd.f32 0.0, %v458
  %v460 = vpop.f32.mrb[0].mxu0
  %v461 = vpop.f32.mrb[0].mxu0
  %v462 = vadd.f32 0.0, %v461
  %v463 = vpop.f32.mrb[0].mxu0
  %464 = vmatprep.mubr.bf16.mxu0 0
  %465 = vmatmul.mubr.bf16.gmra.mrb[0].mxu0 %v293
  %v466 = vpop.f32.mrb[0].mxu0
  %v467 = vadd.f32 0.0, %v466
  %v468 = vpop.f32.mrb[0].mxu0
  %v469 = vpop.f32.mrb[0].mxu0
  %v470 = vadd.f32 0.0, %v469
  %v471 = vpop.f32.mrb[0].mxu0
  %472 = vmatprep.mubr.bf16.mxu0 0
  %473 = vmatmul.mubr.bf16.gmra.mrb[0].mxu0 %v294
  %v474 = vpop.f32.mrb[0].mxu0
  %v475 = vadd.f32 0.0, %v474
  %v476 = vpop.f32.mrb[0].mxu0
  %v477 = vpop.f32.mrb[0].mxu0
  %v478 = vadd.f32 0.0, %v477
  %v479 = vpop.f32.mrb[0].mxu0
  %480 = vmatprep.mubr.bf16.mxu0 0
  %481 = vmatmul.mubr.bf16.gmra.mrb[0].mxu0 %v295
  %v482 = vpop.f32.mrb[0].mxu0
  %v483 = vadd.f32 0.0, %v482
  %v484 = vpop.f32.mrb[0].mxu0
  %v485 = vpop.f32.mrb[0].mxu0
  %v486 = vadd.f32 0.0, %v485
  %v487 = vpop.f32.mrb[0].mxu0
  %488 = vmatprep.mubr.bf16.mxu0 0
  %489 = vmatmul.mubr.bf16.gmra.mrb[0].mxu0 %v296
  %v490 = vpop.f32.mrb[0].mxu0
  %v491 = vadd.f32 0.0, %v490
  %v492 = vpop.f32.mrb[0].mxu0
  %v493 = vpop.f32.mrb[0].mxu0
  %v494 = vadd.f32 0.0, %v493
  %v495 = vpop.f32.mrb[0].mxu0
  %496 = vmatprep.mubr.bf16.mxu0 0
  %497 = vmatmul.mubr.bf16.gmra.mrb[0].mxu0 %v297
  %v498 = vpop.f32.mrb[0].mxu0
  %v499 = vadd.f32 0.0, %v498
  %v500 = vpop.f32.mrb[0].mxu0
  %v501 = vpop.f32.mrb[0].mxu0
  %v502 = vadd.f32 0.0, %v501
  %v503 = vpop.f32.mrb[0].mxu0
  %504 = vmatprep.mubr.bf16.mxu0 0
  %505 = vmatmul.mubr.bf16.gmra.mrb[0].mxu0 %v298
  %v506 = vpop.f32.mrb[0].mxu0
  %v507 = vadd.f32 0.0, %v506
  %v508 = vpop.f32.mrb[0].mxu0
  %v509 = vpop.f32.mrb[0].mxu0
  %v510 = vadd.f32 0.0, %v509
  %v511 = vpop.f32.mrb[0].mxu0
  %512 = vmatprep.mubr.bf16.mxu0 0
  %513 = vmatmul.mubr.bf16.gmra.mrb[0].mxu0 %v299
  %v514 = vpop.f32.mrb[0].mxu0
  %v515 = vadd.f32 0.0, %v514
  %v516 = vpop.f32.mrb[0].mxu0
  %v517 = vpop.f32.mrb[0].mxu0
  %v518 = vadd.f32 0.0, %v517
  %v519 = vpop.f32.mrb[0].mxu0
  %520 = vmatprep.mubr.bf16.mxu0 0
  %521 = vmatmul.mubr.bf16.gmra.mrb[0].mxu0 %v300
  %v522 = vpop.f32.mrb[0].mxu0
  %v523 = vadd.f32 0.0, %v522
  %v524 = vpop.f32.mrb[0].mxu0
  %v525 = vpop.f32.mrb[0].mxu0
  %v526 = vadd.f32 0.0, %v525
  %v527 = vpop.f32.mrb[0].mxu0
  %528 = vmatprep.mubr.bf16.mxu0 0
  %529 = vmatmul.mubr.bf16.gmra.mrb[0].mxu0 %v301
  %v530 = vpop.f32.mrb[0].mxu0
  %v531 = vadd.f32 0.0, %v530
  %v532 = vpop.f32.mrb[0].mxu0
  %v533 = vpop.f32.mrb[0].mxu0
  %v534 = vadd.f32 0.0, %v533
  %v535 = vpop.f32.mrb[0].mxu0
  %536 = vmatprep.mubr.bf16.mxu0 0
  %537 = vmatmul.mubr.bf16.gmra.mrb[0].mxu0 %v302
  %v538 = vpop.f32.mrb[0].mxu0
  %v539 = vadd.f32 0.0, %v538
  %v540 = vpop.f32.mrb[0].mxu0
  %v541 = vpop.f32.mrb[0].mxu0
  %v542 = vadd.f32 0.0, %v541
  %v543 = vpop.f32.mrb[0].mxu0
  %544 = vmatprep.mubr.bf16.mxu0 0
  %545 = vmatmul.mubr.bf16.gmra.mrb[0].mxu0 %v303
  %v546 = vpop.f32.mrb[0].mxu0
  %v547 = vadd.f32 0.0, %v546
  %v548 = vpop.f32.mrb[0].mxu0
  %v549 = vpop.f32.mrb[0].mxu0
  %v550 = vadd.f32 0.0, %v549
  %v551 = vpop.f32.mrb[0].mxu0
  %552 = vdwg.mxu0
  %553 = vst [vmem:[%s3] sm:$0xff] %v403
  %554 = vst [vmem:[%s3 + $0x8] sm:$0xff] %v406
  %555 = vst [vmem:[%s3 + $0x10] sm:$0xff] %v411
  %556 = vst [vmem:[%s3 + $0x18] sm:$0xff] %v414
  %557 = vst [vmem:[%s3 + $0x20] sm:$0xff] %v419
  %558 = vst [vmem:[%s3 + $0x28] sm:$0xff] %v422
  %559 = vst [vmem:[%s3 + $0x30] sm:$0xff] %v427
  %560 = vst [vmem:[%s3 + $0x38] sm:$0xff] %v430
  %561 = vst [vmem:[%s3 + $0x40] sm:$0xff] %v435
  %562 = vst [vmem:[%s3 + $0x48] sm:$0xff] %v438
  %563 = vst [vmem:[%s3 + $0x50] sm:$0xff] %v443
  %564 = vst [vmem:[%s3 + $0x58] sm:$0xff] %v446
  %565 = vst [vmem:[%s3 + $0x60] sm:$0xff] %v451
  %566 = vst [vmem:[%s3 + $0x68] sm:$0xff] %v454
  %567 = vst [vmem:[%s3 + $0x70] sm:$0xff] %v459
  %568 = vst [vmem:[%s3 + $0x78] sm:$0xff] %v462
  %569 = vst [vmem:[%s3 + $0x80] sm:$0xff] %v467
  %570 = vst [vmem:[%s3 + $0x88] sm:$0xff] %v470
  %571 = vst [vmem:[%s3 + $0x90] sm:$0xff] %v475
  %572 = vst [vmem:[%s3 + $0x98] sm:$0xff] %v478
  %573 = vst [vmem:[%s3 + $0xa0] sm:$0xff] %v483
  %574 = vst [vmem:[%s3 + $0xa8] sm:$0xff] %v486
  %575 = vst [vmem:[%s3 + $0xb0] sm:$0xff] %v491
  %576 = vst [vmem:[%s3 + $0xb8] sm:$0xff] %v494
  %577 = vst [vmem:[%s3 + $0xc0] sm:$0xff] %v499
  %578 = vst [vmem:[%s3 + $0xc8] sm:$0xff] %v502
  %579 = vst [vmem:[%s3 + $0xd0] sm:$0xff] %v507
  %580 = vst [vmem:[%s3 + $0xd8] sm:$0xff] %v510
  %581 = vst [vmem:[%s3 + $0xe0] sm:$0xff] %v515
  %582 = vst [vmem:[%s3 + $0xe8] sm:$0xff] %v518
  %583 = vst [vmem:[%s3 + $0xf0] sm:$0xff] %v523
  %584 = vst [vmem:[%s3 + $0xf8] sm:$0xff] %v526
  %585 = vst [vmem:[%s3 + $0x100] sm:$0xff] %v531
  %586 = vst [vmem:[%s3 + $0x108] sm:$0xff] %v534
  %587 = vst [vmem:[%s3 + $0x110] sm:$0xff] %v539
  %588 = vst [vmem:[%s3 + $0x118] sm:$0xff] %v542
  %589 = vst [vmem:[%s3 + $0x120] sm:$0xff] %v547
  %590 = vst [vmem:[%s3 + $0x128] sm:$0xff] %v550
  %v591 = vld [vmem:[%s1] sm:$0x7]
  %v592 = vlaneseq
  %v593 = vshrl.u32 %v592, 7
  %v594 = vlaneseq
  %v595 = vshrl.u32 %v594, 7
  %v596 = vsub.s32 0, %v595
  %v597 = vrot.slane %v591, %v596
  %v598 = vlaneseq
  %v599 = vshrl.u32 %v598, 7
  %v600 = vsub.s32 1, %v599
  %v601 = vrot.slane %v591, %v600
  %v602 = vlaneseq
  %v603 = vshrl.u32 %v602, 7
  %v604 = vsub.s32 2, %v603
  %v605 = vrot.slane %v591, %v604
  %vm606 = vcmp.eq.s32.totalorder %v597, %v593
  %vm607 = vcmp.eq.s32.totalorder %v601, %v593
  %vm608 = vcmp.eq.s32.totalorder %v605, %v593
  %v609 = vsel %vm606, 1, 0
  %v610 = vsel %vm607, 1, 0
  %v611 = vsel %vm608, 1, 0
  %v612 = vcvt.s32.f32 %v609
  %v613 = vcvt.s32.f32 %v610
  %v614 = vcvt.s32.f32 %v611
  %v615 = vpack.c.bf16 %v612, %v612
  %v616 = vpack.c.bf16 %v613, %v613
  %v617 = vpack.c.bf16 %v614, %v614
  %v618 = vpack.c.bf16 %v406, %v403
  %v619 = vpack.c.bf16 %v414, %v411
  %v620 = vpack.c.bf16 %v422, %v419
  %v621 = vpack.c.bf16 %v430, %v427
  %v622 = vpack.c.bf16 %v438, %v435
  %v623 = vpack.c.bf16 %v446, %v443
  %v624 = vpack.c.bf16 %v454, %v451
  %v625 = vpack.c.bf16 %v462, %v459
  %v626 = vpack.c.bf16 %v470, %v467
  %v627 = vpack.c.bf16 %v478, %v475
  %v628 = vpack.c.bf16 %v486, %v483
  %v629 = vpack.c.bf16 %v494, %v491
  %v630 = vpack.c.bf16 %v502, %v499
  %v631 = vpack.c.bf16 %v510, %v507
  %v632 = vpack.c.bf16 %v518, %v515
  %v633 = vpack.c.bf16 %v526, %v523
  %v634 = vpack.c.bf16 %v534, %v531
  %v635 = vpack.c.bf16 %v542, %v539
  %v636 = vpack.c.bf16 %v550, %v547
  %vm637 = vcmask 392192
  %v639 = vsel %vm637, %v617, 0
  %641 = vmatprep.subr.bf16.mxu0 0
  %642 = vmatpush1.bf16.msra.mxu0 %v618
  %643 = vmatprep.subr.bf16.mxu0 0
  %644 = vmatpush1.bf16.msra.mxu0 %v619
  %645 = vmatprep.subr.bf16.mxu0 0
  %646 = vmatpush1.bf16.msra.mxu0 %v620
  %647 = vmatprep.subr.bf16.mxu0 0
  %648 = vmatpush1.bf16.msra.mxu0 %v621
  %649 = vmatprep.subr.bf16.mxu0 0
  %650 = vmatpush1.bf16.msra.mxu0 %v622
  %651 = vmatprep.subr.bf16.mxu0 0
  %652 = vmatpush1.bf16.msra.mxu0 %v623
  %653 = vmatprep.subr.bf16.mxu0 0
  %654 = vmatpush1.bf16.msra.mxu0 %v624
  %655 = vmatprep.subr.bf16.mxu0 0
  %656 = vmatpush1.bf16.msra.mxu0 %v625
  %657 = vmatprep.subr.bf16.mxu0 0
  %658 = vmatpush1.bf16.msra.mxu0 %v626
  %659 = vmatprep.subr.bf16.mxu0 0
  %660 = vmatpush1.bf16.msra.mxu0 %v627
  %661 = vmatprep.subr.bf16.mxu0 0
  %662 = vmatpush1.bf16.msra.mxu0 %v628
  %663 = vmatprep.subr.bf16.mxu0 0
  %664 = vmatpush1.bf16.msra.mxu0 %v629
  %665 = vmatprep.subr.bf16.mxu0 0
  %666 = vmatpush1.bf16.msra.mxu0 %v630
  %667 = vmatprep.subr.bf16.mxu0 0
  %668 = vmatpush1.bf16.msra.mxu0 %v631
  %669 = vmatprep.subr.bf16.mxu0 0
  %670 = vmatpush1.bf16.msra.mxu0 %v632
  %671 = vmatprep.subr.bf16.mxu0 0
  %672 = vmatpush1.bf16.msra.mxu0 %v633
  %673 = vmatprep.mubr.bf16.mxu0 %v616
  %674 = vmatmul.mubr.bf16.gmra.mrb[0].mxu0 %v615
  %v675 = vpop.f32.mrb[0].mxu0
  %v676 = vadd.f32 0.0, %v675
  %v677 = vpop.f32.mrb[0].mxu0
  %v678 = vpop.f32.mrb[0].mxu0
  %v679 = vpop.f32.mrb[0].mxu0
  %680 = vdwg.mxu0
  %681 = vmatprep.subr.bf16.mxu0 0
  %682 = vmatpush1.bf16.msra.mxu0 %v634
  %683 = vmatprep.subr.bf16.mxu0 0
  %684 = vmatpush1.bf16.msra.mxu0 %v635
  %685 = vmatprep.subr.bf16.mxu0 0
  %686 = vmatpush1.bf16.msra.mxu0 %v636
  %687 = vmatprep.subr.bf16.mxu0 0
  %688 = vmatpush1.bf16.msra.mxu0 0
  %689 = vmatprep.subr.bf16.mxu0 0
  %690 = vmatpush1.bf16.msra.mxu0 0
  %691 = vmatprep.subr.bf16.mxu0 0
  %692 = vmatpush1.bf16.msra.mxu0 0
  %693 = vmatprep.subr.bf16.mxu0 0
  %694 = vmatpush1.bf16.msra.mxu0 0
  %695 = vmatprep.subr.bf16.mxu0 0
  %696 = vmatpush1.bf16.msra.mxu0 0
  %697 = vmatprep.subr.bf16.mxu0 0
  %698 = vmatpush1.bf16.msra.mxu0 0
  %699 = vmatprep.subr.bf16.mxu0 0
  %700 = vmatpush1.bf16.msra.mxu0 0
  %701 = vmatprep.subr.bf16.mxu0 0
  %702 = vmatpush1.bf16.msra.mxu0 0
  %703 = vmatprep.subr.bf16.mxu0 0
  %704 = vmatpush1.bf16.msra.mxu0 0
  %705 = vmatprep.subr.bf16.mxu0 0
  %706 = vmatpush1.bf16.msra.mxu0 0
  %707 = vmatprep.subr.bf16.mxu0 0
  %708 = vmatpush1.bf16.msra.mxu0 0
  %709 = vmatprep.subr.bf16.mxu0 0
  %710 = vmatpush1.bf16.msra.mxu0 0
  %711 = vmatprep.subr.bf16.mxu0 0
  %712 = vmatpush1.bf16.msra.mxu0 0
  %713 = vmatprep.mubr.bf16.mxu0 0
  %714 = vmatmul.mubr.bf16.gmra.mrb[0].mxu0 %v639
  %v715 = vpop.f32.mrb[0].mxu0
  %v716 = vadd.f32 %v676, %v715
  %v717 = vpop.f32.mrb[0].mxu0
  %v718 = vpop.f32.mrb[0].mxu0
  %v719 = vpop.f32.mrb[0].mxu0
  %720 = vdwg.mxu0
  %721 = vst [vmem:[%s4] sm:$0xff] %v716
  // Predicated region
  $region14: #{glycan_gcn_forward.1} parent=0 // pred_check
    _
  $region15: #{glycan_gcn_forward.1} parent=0 // pred_check_branch
    %723 = sbr.rel (0) target = $region17
  $region16: #{glycan_gcn_forward.1} parent=0 // pred_region
    _
  $region17: #{glycan_gcn_forward.1} parent=0 // pred_fallthru
    _
  // Predicated region
  $region18: #{glycan_gcn_forward.1} parent=0 // pred_check
    _
  $region19: #{glycan_gcn_forward.1} parent=0 // pred_check_branch
    %725 = sbr.rel (0) target = $region21
  $region20: #{glycan_gcn_forward.1} parent=0 // pred_region
    _
  $region21: #{glycan_gcn_forward.1} parent=0 // pred_fallthru
    _
  // Predicated region
  $region22: #{glycan_gcn_forward.1} parent=0 // pred_check
    _
  $region23: #{glycan_gcn_forward.1} parent=0 // pred_check_branch
    %727 = sbr.rel (0) target = $region25
  $region24: #{glycan_gcn_forward.1} parent=0 // pred_region
    _
  $region25: #{glycan_gcn_forward.1} parent=0 // pred_fallthru
    _
  // Predicated region
  $region26: #{glycan_gcn_forward.1} parent=0 // pred_check
    _
  $region27: #{glycan_gcn_forward.1} parent=0 // pred_check_branch
    %729 = sbr.rel (0) target = $region29
  $region28: #{glycan_gcn_forward.1} parent=0 // pred_region
    _
  $region29: #{glycan_gcn_forward.1} parent=0 // pred_fallthru
    _

</llo_original>
